<compile_context>
chip_gen: v7x
topology: tpu7x:2x2x1
jax: 0.10.0
libtpu: 0.0.40
codegen_flags: <defaults>
</compile_context>

<pallas_src>
import functools

import numpy as np
import jax
import jax.numpy as jnp
from jax.experimental import pallas as pl
from jax.experimental.pallas import tpu as pltpu

_LANE = 128

coco_non_object_labels = {
    0, 94, 97, 101, 102, 103, 106, 111, 113, 114, 115, 116, 117, 118, 119, 120,
    124, 125, 126, 127, 129, 131, 132, 134, 135, 136, 138, 139, 140, 141, 142,
    143, 145, 146, 147, 148, 149, 150, 151, 152, 154, 155, 157, 159, 160, 162,
    164, 167, 168, 169, 171, 172, 173, 174, 175, 176, 177, 178, 179, 182, 183,
}
coco_num_classes_without_unknown_class = 182


def _weights_map_kernel(mask_ref, x_ref, u_ref, osum_ref, o_acc, *, dw, w1, thw):
    """Per (batch, split, lane-tile) step: unscaled weights map + running sum(o)."""
    t = pl.program_id(2)

    @pl.when(t == 0)
    def _init():
        o_acc[...] = jnp.zeros_like(o_acc)

    x = x_ref[0].astype(jnp.float32)                 # (C, thw), upcast in VMEM
    m = mask_ref[...]                                # (C, 1) 0/1 object-channel mask
    # Channel contraction: object_map for this lane tile (VPU mul + sublane reduce).
    o = jnp.sum(x * m, axis=0, keepdims=True)        # (1, thw)

    # Unscaled weights map: w0*o + w1*(1-o) == (w0-w1)*o + w1  (one fused madd).
    u_ref[...] = (dw * o + w1).reshape(1, 1, thw)

    # Vector accumulator in VMEM; padded lanes hold x==0 -> o==0 -> contribute 0.
    o_acc[...] += o

    @pl.when(t == pl.num_programs(2) - 1)
    def _finalize():
        osum_ref[...] = jnp.sum(o_acc[...]).reshape(1, 1, 1, 1)


def weighted_object_aware_mapper(input_semantics, weights, object_indices=None,
                                 *, max_block_bytes=4 * 1024 * 1024):
    """Pallas equivalent of WeightedObjectAwareMapper(weights).forward(input_semantics)."""
    N, C, H, W = input_semantics.shape
    HW = H * W

    if object_indices is None:
        num_classes = coco_num_classes_without_unknown_class + 1
        object_indices = sorted(set(range(num_classes + 1)) - coco_non_object_labels)
    else:
        object_indices = sorted(object_indices)

    mask_np = np.zeros((C, 1), np.float32)
    mask_np[np.asarray(object_indices, dtype=np.int64), 0] = 1.0
    mask = jnp.asarray(mask_np)

    w0 = float(weights[0])
    w1 = float(weights[1])
    dw = w0 - w1

    # Native dtype all the way into the kernel (upcast happens in VMEM).
    x = input_semantics.reshape(N, C, HW)
    itemsize = jnp.dtype(x.dtype).itemsize

    # --- Lane-tile selection: cdiv grid with ragged (zero) padding. ---
    # units = number of 128-lane columns needed; k_budget = how many of those
    # fit in one input block under max_block_bytes (x2 double buffers stays
    # well inside every generation's default scoped VMEM, incl. v7x's 64 MiB).
    units = pl.cdiv(HW, _LANE)
    k_budget = max(1, max_block_bytes // (C * itemsize * _LANE))
    blocks_needed = pl.cdiv(units, min(units, k_budget))
    # Split the lane-tile axis across 2 parallel halves so both v7x TCs stream
    # HBM even when N is small/odd; skip the split when one block suffices.
    n_split = 2 if blocks_needed >= 2 else 1
    n_t_inner = pl.cdiv(blocks_needed, n_split)
    n_blocks = n_split * n_t_inner
    k = pl.cdiv(units, n_blocks)          # <= k_budget by construction
    thw = k * _LANE
    HWp = n_blocks * thw

    pad = HWp - HW
    if pad:
        x = jnp.pad(x, ((0, 0), (0, 0), (0, pad)))   # zeros -> o==0 on padded lanes

    kernel = functools.partial(_weights_map_kernel, dw=dw, w1=w1, thw=thw)

    u_map, o_part = pl.pallas_call(
        kernel,
        out_shape=(
            jax.ShapeDtypeStruct((N, 1, HWp), jnp.float32),          # unscaled weights map
            jax.ShapeDtypeStruct((N, n_split, 1, 1), jnp.float32),   # per-(batch,split) sum(o)
        ),
        grid_spec=pltpu.PrefetchScalarGridSpec(
            num_scalar_prefetch=0,
            grid=(N, n_split, n_t_inner),
            in_specs=[
                # channel mask: tiny, resident across the whole grid
                pl.BlockSpec((C, 1), lambda n, s, t: (0, 0)),
                # input semantics lane tile
                pl.BlockSpec((1, C, thw),
                             lambda n, s, t, _nt=n_t_inner: (n, 0, s * _nt + t)),
            ],
            out_specs=[
                pl.BlockSpec((1, 1, thw),
                             lambda n, s, t, _nt=n_t_inner: (n, 0, s * _nt + t)),
                pl.BlockSpec((1, 1, 1, 1), lambda n, s, t: (n, s, 0, 0)),
            ],
            scratch_shapes=[
                pltpu.VMEM((1, thw), jnp.float32),    # vector accumulator for sum(o)
            ],
        ),
        compiler_params=pltpu.CompilerParams(
            dimension_semantics=("parallel", "parallel", "arbitrary"),
        ),
    )(mask, x)

    # --- Tiny XLA epilogue: global normalization, scale + un-pad fused. ---
    # sum(o + (1-o)) == N*H*W exactly; sum(weights_map) = (w0-w1)*sum(o) + w1*N*H*W.
    sum_o = jnp.sum(o_part)
    total = jnp.float32(N * HW)
    denom = dw * sum_o + w1 * total
    scale = total / denom

    weights_map = (u_map[:, :, :HW] * scale).reshape(N, 1, H, W)
    return weights_map


if __name__ == "__main__":
    key = jax.random.PRNGKey(0)

    # Small shape consistent with the module: default COCO labels need
    # channel indices up to 183, so C = 184; batch=2, spatial 16x16.
    N, H, W = 2, 16, 16
    num_classes = coco_num_classes_without_unknown_class + 1   # 183
    C = num_classes + 1                                        # 184

    labels = jax.random.randint(key, (N, H, W), 0, C)
    input_semantics = jnp.transpose(
        jax.nn.one_hot(labels, C, dtype=jnp.float32), (0, 3, 1, 2))  # (N, C, H, W)

    weights = (2.0, 0.5)   # (object weight, non-object weight)

    out = weighted_object_aware_mapper(input_semantics, weights)
    out = jax.block_until_ready(out)

    # Pure-JAX reference of the PyTorch forward.
    obj_idx = jnp.asarray(
        sorted(set(range(num_classes + 1)) - coco_non_object_labels))
    o = jnp.sum(input_semantics[:, obj_idx], axis=1, keepdims=True)
    no = 1.0 - o
    wm = weights[0] * o + weights[1] * no
    ref = wm / jnp.sum(wm) * jnp.sum(o + no)

    assert out.shape == (N, 1, H, W), out.shape
    assert jnp.allclose(out, ref, atol=1e-5, rtol=1e-5), (out, ref)
    print("KERNEL_OK")
</pallas_src>

<mosaic_0001>
module attributes {stable_mosaic.version = 11 : i64} {
  func.func @_weights_map_kernel(%arg0: i32, %arg1: i32, %arg2: i32, %arg3: memref<184x1xf32, #tpu.memory_space<vmem>>, %arg4: memref<1x184x256xf32, #tpu.memory_space<vmem>>, %arg5: memref<1x1x256xf32, #tpu.memory_space<vmem>>, %arg6: memref<1x1x1x1xf32, #tpu.memory_space<vmem>>, %arg7: memref<1x256xf32, #tpu.memory_space<vmem>>) attributes {dimension_semantics = [#tpu.dimension_semantics<parallel>, #tpu.dimension_semantics<parallel>, #tpu.dimension_semantics<arbitrary>], iteration_bounds = array<i64: 2, 1, 1>, scalar_prefetch = 0 : i64, scratch_operands = 1 : i64, tpu.core_type = #tpu.core_type<tc>, window_params = [{pipeline_mode = #tpu.pipeline_mode<synchronous>, transform_indices = @transform_0, window_bounds = array<i64: 184, 1>}, {transform_indices = @transform_1, window_bounds = array<i64: 1, 184, 256>}, {transform_indices = @transform_2, window_bounds = array<i64: 1, 1, 256>}, {transform_indices = @transform_3, window_bounds = array<i64: 1, 1, 1, 1>}]} {
    %c0_i32 = arith.constant 0 : i32
    %0 = arith.cmpi eq, %arg2, %c0_i32 : i32
    %1 = arith.extui %0 : i1 to i32
    %c0_i32_0 = arith.constant 0 : i32
    %2 = arith.cmpi ne, %1, %c0_i32_0 : i32
    scf.if %2 {
      %cst_16 = arith.constant 0.000000e+00 : f32
      %22 = vector.broadcast %cst_16 : f32 to vector<1x256xf32>
      %c0_17 = arith.constant 0 : index
      %c0_18 = arith.constant 0 : index
      %23 = vector.load %arg7[%c0_17, %c0_18] : memref<1x256xf32, #tpu.memory_space<vmem>>, vector<1x256xf32>
      tpu.vector_store %arg7[%c0_17, %c0_18], %22 {strides = array<i32>} : memref<1x256xf32, #tpu.memory_space<vmem>>, vector<1x256xf32>,
    } else {
    }
    %c0 = arith.constant 0 : index
    %c0_1 = arith.constant 0 : index
    %c0_2 = arith.constant 0 : index
    %3 = vector.load %arg4[%c0, %c0_1, %c0_2] : memref<1x184x256xf32, #tpu.memory_space<vmem>>, vector<1x184x256xf32>
    %4 = vector.shape_cast %3 : vector<1x184x256xf32> to vector<184x256xf32>
    %c0_3 = arith.constant 0 : index
    %c0_4 = arith.constant 0 : index
    %5 = vector.load %arg3[%c0_3, %c0_4] : memref<184x1xf32, #tpu.memory_space<vmem>>, vector<184x1xf32>
    %6 = vector.broadcast %5 : vector<184x1xf32> to vector<184x256xf32>
    %7 = arith.mulf %4, %6 : vector<184x256xf32>
    %cst = arith.constant dense<0.000000e+00> : vector<256xf32>
    %8 = vector.multi_reduction <add>, %7, %cst [0] : vector<184x256xf32> to vector<256xf32>
    %9 = vector.shape_cast %8 : vector<256xf32> to vector<1x256xf32>
    %cst_5 = arith.constant 1.500000e+00 : f32
    %10 = vector.broadcast %cst_5 : f32 to vector<1x256xf32>
    %11 = arith.mulf %10, %9 : vector<1x256xf32>
    %cst_6 = arith.constant 5.000000e-01 : f32
    %12 = vector.broadcast %cst_6 : f32 to vector<1x256xf32>
    %13 = arith.addf %11, %12 : vector<1x256xf32>
    %14 = vector.shape_cast %13 : vector<1x256xf32> to vector<1x1x256xf32>
    %c0_7 = arith.constant 0 : index
    %c0_8 = arith.constant 0 : index
    %c0_9 = arith.constant 0 : index
    %15 = vector.load %arg5[%c0_7, %c0_8, %c0_9] : memref<1x1x256xf32, #tpu.memory_space<vmem>>, vector<1x1x256xf32>
    tpu.vector_store %arg5[%c0_7, %c0_8, %c0_9], %14 {strides = array<i32>} : memref<1x1x256xf32, #tpu.memory_space<vmem>>, vector<1x1x256xf32>,
    %c0_10 = arith.constant 0 : index
    %c0_11 = arith.constant 0 : index
    %16 = vector.load %arg7[%c0_10, %c0_11] : memref<1x256xf32, #tpu.memory_space<vmem>>, vector<1x256xf32>
    %17 = arith.addf %16, %9 : vector<1x256xf32>
    %c0_12 = arith.constant 0 : index
    %c0_13 = arith.constant 0 : index
    %18 = vector.load %arg7[%c0_12, %c0_13] : memref<1x256xf32, #tpu.memory_space<vmem>>, vector<1x256xf32>
    tpu.vector_store %arg7[%c0_12, %c0_13], %17 {strides = array<i32>} : memref<1x256xf32, #tpu.memory_space<vmem>>, vector<1x256xf32>,
    %c0_i32_14 = arith.constant 0 : i32
    %19 = arith.cmpi eq, %arg2, %c0_i32_14 : i32
    %20 = arith.extui %19 : i1 to i32
    %c0_i32_15 = arith.constant 0 : i32
    %21 = arith.cmpi ne, %20, %c0_i32_15 : i32
    scf.if %21 {
      %c0_16 = arith.constant 0 : index
      %c0_17 = arith.constant 0 : index
      %22 = vector.load %arg7[%c0_16, %c0_17] : memref<1x256xf32, #tpu.memory_space<vmem>>, vector<1x256xf32>
      %23 = vector.shape_cast %22 : vector<1x256xf32> to vector<1x1x256xf32>
      %cst_18 = arith.constant dense<0.000000e+00> : vector<1xf32>
      %24 = vector.multi_reduction <add>, %23, %cst_18 [1, 2] : vector<1x1x256xf32> to vector<1xf32>
      %25 = vector.shape_cast %24 : vector<1xf32> to vector<1x1x1xf32>
      %26 = vector.extract %25[0, 0, 0] : f32 from vector<1x1x1xf32>
      %27 = vector.broadcast %26 : f32 to vector<1x1x1x1xf32>
      %c0_19 = arith.constant 0 : index
      %c0_20 = arith.constant 0 : index
      %c0_21 = arith.constant 0 : index
      %c0_22 = arith.constant 0 : index
      %28 = vector.load %arg6[%c0_19, %c0_20, %c0_21, %c0_22] : memref<1x1x1x1xf32, #tpu.memory_space<vmem>>, vector<1x1x1x1xf32>
      tpu.vector_store %arg6[%c0_19, %c0_20, %c0_21, %c0_22], %27 {strides = array<i32>} : memref<1x1x1x1xf32, #tpu.memory_space<vmem>>, vector<1x1x1x1xf32>,
    } else {
    }
    return
  }
  func.func @transform_0(%arg0: i32, %arg1: i32, %arg2: i32) -> (i32, i32) {
    %c0_i32 = arith.constant 0 : i32
    %c0_i32_0 = arith.constant 0 : i32
    %c0_i32_1 = arith.constant 0 : i32
    return %c0_i32, %c0_i32_0 : i32, i32
  }
  func.func @transform_1(%arg0: i32, %arg1: i32, %arg2: i32) -> (i32, i32, i32) {
    %c1_i32 = arith.constant 1 : i32
    %0 = arith.muli %arg1, %c1_i32 : i32
    %1 = arith.addi %0, %arg2 : i32
    %c0_i32 = arith.constant 0 : i32
    %c0_i32_0 = arith.constant 0 : i32
    return %arg0, %c0_i32, %1 : i32, i32, i32
  }
  func.func @transform_2(%arg0: i32, %arg1: i32, %arg2: i32) -> (i32, i32, i32) {
    %c1_i32 = arith.constant 1 : i32
    %0 = arith.muli %arg1, %c1_i32 : i32
    %1 = arith.addi %0, %arg2 : i32
    %c0_i32 = arith.constant 0 : i32
    %c0_i32_0 = arith.constant 0 : i32
    return %arg0, %c0_i32, %1 : i32, i32, i32
  }
  func.func @transform_3(%arg0: i32, %arg1: i32, %arg2: i32) -> (i32, i32, i32, i32) {
    %c0_i32 = arith.constant 0 : i32
    %c0_i32_0 = arith.constant 0 : i32
    %c0_i32_1 = arith.constant 0 : i32
    return %arg0, %arg1, %c0_i32, %c0_i32_0 : i32, i32, i32, i32
  }
}

</mosaic_0001>

<llo_original>
// kernel: tpu_custom_call.1
$region0: #{tpu_custom_call.1}
  #allocation0 [shape = 'u32[]', space=smem, size = 0x4, offset = 0x4, fixed_abs, tag = 'smem constant byte address 0x4 - core index']
  #allocation1 [shape = 'u32[144,128]{1,0:T(1,128)}', space=vmem, size = 0x12000, scoped, tag = 'internal scratch']
  #allocation2 [shape = 'f32[1,256]{1,0:T(1,128)}', space=vmem, size = 0x400, scoped, tag = 'scratch operand']
  %s0 = inlined_call_operand.vmem [shape: f32[184,1], index: 0, kind: input, shape index: {}]
  %s1 = inlined_call_operand.hbm [shape: f32[2,184,256], index: 1, kind: input, shape index: {}]
  %s2 = inlined_call_operand.hbm [shape: f32[2,1,256], index: 2, kind: output, shape index: {0}]
  %s3 = inlined_call_operand.vmem [shape: f32[2,1,1,1], index: 3, kind: output, shape index: {1}]
  %4 = xla_tuple %s2, %s3
  %s5 = sld [smem:[#allocation0]]
  $region61: #{tpu_custom_call.1} parent=0
    _
  %s7 = ssub.s32 1, %s5
  %s8 = scalar_select 0, %s7, %s5
  $region1: #{tpu_custom_call.1} parent=0
    #allocation3 [shape = 'u8[376832]{0}', space=vmem, size = 0x5c000, scoped, tag = 'input window, operand 1']
    #allocation4 [shape = 's32[2]{0}', space=sflag, size = 0x8, scoped, tag = 'scoped memory for tpu_custom_call.1']
    #allocation5 [shape = 's32[2]{0}', space=sflag, size = 0x8, scoped, tag = 'scoped memory for tpu_custom_call.1']
    #allocation6 [shape = 'u8[2048]{0}', space=vmem, size = 0x800, scoped, tag = 'output window, operand 0']
    %9 = vsyncpa [#allocation4], 0
    %s10 = scalar_lea.sflag [#allocation4], 1
    %11 = vsyncpa %s10, 0
    %12 = vsyncpa [#allocation5], 0
    %s13 = scalar_lea.sflag [#allocation5], 1
    %14 = vsyncpa %s13, 0
    loop: start=0, step=1, limit=4
    $region2: #{tpu_custom_call.1} parent=1 // loop_pre_header
      _
    $region3: #{tpu_custom_call.1} parent=1 // loop_header
      %s16 = sphi 0, %s20
      %p17 = scmp.ge.s32.totalorder %s16, 4
      %s23 = sphi 0, %s42
      %s24 = sphi 0, %s38
      %s25 = sphi 0, %s34
      %s26 = sphi 0, %s23
      %s27 = sphi 0, %s24
      %s28 = sphi 0, %s25
      %s29 = sphi 0, %s26
      %s30 = sphi 0, %s27
      %s31 = sphi 0, %s28
      %s43 = sphi 0, %s43
      %s45 = sphi 0, %s43
      %s46 = sphi 0, %s45
      %s60 = sphi 0, %s46
      %s70 = sphi 0, %s72
      %s73 = sphi 0, %s70
      %s74 = sphi 0, %s73
      %s90 = sphi 0, %s74
      %s100 = sphi 0, %s102
      %s103 = sphi 0, %s100
      %s104 = sphi 0, %s103
      %s120 = sphi 0, %s104
      %s128 = sphi 0, %s130
      %s131 = sphi 0, %s128
      %s132 = sphi 0, %s131
      %s148 = sphi 0, %s132
    $region4: #{tpu_custom_call.1} parent=1 // loop_header_branch
      %19 = sbr.rel (%p17) target = $region8
    $region5: #{tpu_custom_call.1} parent=1 // loop_body
      %s21 = ssub.s32 %s16, 1
      %s22 = ssub.s32 %s16, 2
      %s32 = sadd.s32 1, %s25
      %p33 = scmp.ge.s32.totalorder %s32, 1
      %s34 = scalar_select %p33, 0, %s32
      %s35 = sadd.s32 1, %s24
      %s36 = scalar_select %p33, %s35, %s24
      %p37 = scmp.ge.s32.totalorder %s36, 1
      %s38 = scalar_select %p37, 0, %s36
      %s39 = sadd.s32 1, %s23
      %s40 = scalar_select %p37, %s39, %s23
      %p41 = scmp.ge.s32.totalorder %s40, 2
      %s42 = scalar_select %p41, 0, %s40
      %s44 = sadd.s32 %s43, 1
      %p47 = scmp.eq.s32.totalorder %s16, 1
      %p48 = scmp.ne.s32.totalorder %s43, %s45
      %p49 = scmp.eq.s32.totalorder %s16, 0
      %p50 = por %p48, %p49
      %p51 = scmp.ne.s32.totalorder %s43, %s45
      %p52 = scmp.eq.s32.totalorder %s21, 1
      %p53 = por %p51, %p52
      %p54 = scmp.ne.s32.totalorder %s45, %s46
      %p55 = scmp.eq.s32.totalorder %s21, 0
      %p56 = por %p54, %p55
      %p57 = scmp.ne.s32.totalorder %s45, %s46
      %p58 = scmp.eq.s32.totalorder %s22, 1
      %p59 = por %p57, %p58
      %p61 = scmp.ne.s32.totalorder %s46, %s60
      %p62 = scmp.eq.s32.totalorder %s22, 0
      %p63 = por %p61, %p62
      %s64 = sadd.s32 %s24, %s25
      %s65 = sadd.s32 %s38, %s34
      %s66 = ssub.s32 %s23, %s42
      %s67 = ssub.s32 %s64, %s65
      %s68 = sor.u32 %s66, %s67
      %p69 = scmp.eq.s32.totalorder %s68, 0
      %s71 = sadd.s32 %s70, 1
      %s72 = scalar_select %p69, %s70, %s71
      %p75 = pneg %p69
      %p76 = scmp.eq.s32.totalorder %s16, 1
      %p77 = por %p75, %p76
      %p78 = scmp.ne.s32.totalorder %s70, %s73
      %p79 = scmp.eq.s32.totalorder %s16, 0
      %p80 = por %p78, %p79
      %p81 = scmp.ne.s32.totalorder %s70, %s73
      %p82 = scmp.eq.s32.totalorder %s21, 1
      %p83 = por %p81, %p82
      %p84 = scmp.ne.s32.totalorder %s73, %s74
      %p85 = scmp.eq.s32.totalorder %s21, 0
      %p86 = por %p84, %p85
      %p87 = scmp.ne.s32.totalorder %s73, %s74
      %p88 = scmp.eq.s32.totalorder %s22, 1
      %p89 = por %p87, %p88
      %p91 = scmp.ne.s32.totalorder %s74, %s90
      %p92 = scmp.eq.s32.totalorder %s22, 0
      %p93 = por %p91, %p92
      %s94 = sadd.s32 %s24, %s25
      %s95 = sadd.s32 %s38, %s34
      %s96 = ssub.s32 %s23, %s42
      %s97 = ssub.s32 %s94, %s95
      %s98 = sor.u32 %s96, %s97
      %p99 = scmp.eq.s32.totalorder %s98, 0
      %s101 = sadd.s32 %s100, 1
      %s102 = scalar_select %p99, %s100, %s101
      %p105 = pneg %p99
      %p106 = scmp.eq.s32.totalorder %s16, 1
      %p107 = por %p105, %p106
      %p108 = scmp.ne.s32.totalorder %s100, %s103
      %p109 = scmp.eq.s32.totalorder %s16, 0
      %p110 = por %p108, %p109
      %p111 = scmp.ne.s32.totalorder %s100, %s103
      %p112 = scmp.eq.s32.totalorder %s21, 1
      %p113 = por %p111, %p112
      %p114 = scmp.ne.s32.totalorder %s103, %s104
      %p115 = scmp.eq.s32.totalorder %s21, 0
      %p116 = por %p114, %p115
      %p117 = scmp.ne.s32.totalorder %s103, %s104
      %p118 = scmp.eq.s32.totalorder %s22, 1
      %p119 = por %p117, %p118
      %p121 = scmp.ne.s32.totalorder %s104, %s120
      %p122 = scmp.eq.s32.totalorder %s22, 0
      %p123 = por %p121, %p122
      %s124 = ssub.s32 %s23, %s42
      %s125 = ssub.s32 %s24, %s38
      %s126 = sor.u32 %s124, %s125
      %p127 = scmp.eq.s32.totalorder %s126, 0
      %s129 = sadd.s32 %s128, 1
      %s130 = scalar_select %p127, %s128, %s129
      %p133 = pneg %p127
      %p134 = scmp.eq.s32.totalorder %s16, 1
      %p135 = por %p133, %p134
      %p136 = scmp.ne.s32.totalorder %s128, %s131
      %p137 = scmp.eq.s32.totalorder %s16, 0
      %p138 = por %p136, %p137
      %p139 = scmp.ne.s32.totalorder %s128, %s131
      %p140 = scmp.eq.s32.totalorder %s21, 1
      %p141 = por %p139, %p140
      %p142 = scmp.ne.s32.totalorder %s131, %s132
      %p143 = scmp.eq.s32.totalorder %s21, 0
      %p144 = por %p142, %p143
      %p145 = scmp.ne.s32.totalorder %s131, %s132
      %p146 = scmp.eq.s32.totalorder %s22, 1
      %p147 = por %p145, %p146
      %p149 = scmp.ne.s32.totalorder %s132, %s148
      %p150 = scmp.eq.s32.totalorder %s22, 0
      %p151 = por %p149, %p150
      %p152 = scmp.le.s32.totalorder 1, %s16
      %p153 = scmp.lt.s32.totalorder %s16, 3
      %p154 = pnand %p152, %p153
      %p155 = pneg %p154
      // Predicated region
      $region9: #{tpu_custom_call.1} parent=5 // pred_check
        _
      $region10: #{tpu_custom_call.1} parent=5 // pred_check_branch
        %157 = sbr.rel (%p154) target = $region12
      $region11: #{tpu_custom_call.1} parent=5 // pred_region
        %s158 = ssub.s32 %s16, 1
        // Predicated region
        $region13: #{tpu_custom_call.1} parent=11 // pred_check
          %p159 = pneg %p56
        $region14: #{tpu_custom_call.1} parent=11 // pred_check_branch
          %161 = sbr.rel (%p159) target = $region16
        $region15: #{tpu_custom_call.1} parent=11 // pred_region
          _
        $region16: #{tpu_custom_call.1} parent=11 // pred_fallthru
          _
      $region12: #{tpu_custom_call.1} parent=5 // pred_fallthru
        _
      %p162 = scmp.lt.s32.totalorder %s16, 2
      // Predicated region
      $region17: #{tpu_custom_call.1} parent=5 // pred_check
        %p163 = pneg %p162
      $region18: #{tpu_custom_call.1} parent=5 // pred_check_branch
        %165 = sbr.rel (%p163) target = $region20
      $region19: #{tpu_custom_call.1} parent=5 // pred_region
        // Predicated region
        $region21: #{tpu_custom_call.1} parent=19 // pred_check
          %p166 = pneg %p80
        $region22: #{tpu_custom_call.1} parent=19 // pred_check_branch
          %168 = sbr.rel (%p166) target = $region24
        $region23: #{tpu_custom_call.1} parent=19 // pred_region
          %s169 = sand.u32 %s70, 1
          %s170 = scalar_lea.sflag [#allocation4], %s169
          %s171 = sand.u32 %s70, 1
          %s172 = smul.addr %s171, 368
          %s173 = scalar_lea.vmem [#allocation3], %s172
          %s174 = sadd.s32 %s24, %s25
          %s175 = smul.u32 2, %s174
          %s177 = ssub.s32 5888, 5888
          %178 = vsyncadd %s170, %s177
          %s179 = smul.addr %s23, 46
          %s180 = sadd.s32 %s175, %s179
          %s181 = smul.addr %s180, 128
          %s182 = scalar_lea.hbm %s1, %s181
          %s183 = sshll.u32 %s173, 4
          %s184 = int_to_ptr.vmem [resolvable:$true] %s183
          %189 = dma.hbm_to_vmem [thread:$0]  %s182, 5888, %s184, %s170, 256, 256, 16
        $region24: #{tpu_custom_call.1} parent=19 // pred_fallthru
          _
      $region20: #{tpu_custom_call.1} parent=5 // pred_fallthru
        _
      %p190 = scmp.le.s32.totalorder 1, %s16
      %p191 = scmp.lt.s32.totalorder %s16, 3
      %p192 = pnand %p190, %p191
      %p193 = pneg %p192
      // Predicated region
      $region25: #{tpu_custom_call.1} parent=5 // pred_check
        _
      $region26: #{tpu_custom_call.1} parent=5 // pred_check_branch
        %195 = sbr.rel (%p192) target = $region28
      $region27: #{tpu_custom_call.1} parent=5 // pred_region
        %s196 = ssub.s32 %s16, 1
        %s197 = sand.u32 %s73, 1
        %s198 = scalar_lea.sflag [#allocation4], %s197
        %s199 = sand.u32 %s73, 1
        %s200 = smul.addr %s199, 368
        %s201 = scalar_lea.vmem [#allocation3], %s200
        // Predicated region
        $region29: #{tpu_custom_call.1} parent=27 // pred_check
          %p202 = pneg %p86
        $region30: #{tpu_custom_call.1} parent=27 // pred_check_branch
          %204 = sbr.rel (%p202) target = $region32
        $region31: #{tpu_custom_call.1} parent=27 // pred_region
          %205 = dma.done %s198, 5888
        $region32: #{tpu_custom_call.1} parent=27 // pred_fallthru
          _
        %p206 = pneg %p56
        %p207 = pneg %p53
        %s208 = sand.u32 %s73, 1
        %s209 = scalar_lea.sflag [#allocation4], %s208
        %s210 = sand.u32 %s73, 1
        %s211 = smul.addr %s210, 368
        %s212 = scalar_lea.vmem [#allocation3], %s211
        %p213 = pneg %p86
        %p214 = pneg %p83
        %p215 = pneg %p116
        %p216 = pneg %p113
        %s217 = sand.u32 %s103, 1
        %s218 = scalar_lea.sflag [#allocation5], %s217
        %s219 = sand.u32 %s103, 1
        %s220 = smul.addr %s219, 2
        %s221 = scalar_lea.vmem [#allocation6], %s220
        %p222 = pneg %p144
        %p223 = pneg %p141
        %p224 = scmp.lt.s32.totalorder %s26, 1
        %s225 = scalar_select %p224, %s26, 1
        %p226 = scmp.lt.s32.totalorder %s27, 0
        %s227 = scalar_select %p226, %s27, 0
        %s228 = sadd.s32 %s227, %s225
        %s229 = scalar_lea.vmem %s3, %s228
        %s230 = sadd.s32 %s27, %s28
        %s231 = smul.u32 2, %s230
        %s232 = sadd.s32 %s27, %s28
        %s233 = smul.u32 2, %s232
        %p234 = scmp.lt.s32.totalorder %s26, 1
        %s235 = scalar_select %p234, %s26, 1
        %p236 = scmp.lt.s32.totalorder %s27, 0
        %s237 = scalar_select %p236, %s27, 0
        %s238 = sadd.s32 %s237, %s235
        %s239 = scalar_lea.vmem %s3, %s238
        %p240 = scmp.eq.s32.totalorder %s28, 0
        // Predicated region
        $region33: #{tpu_custom_call.1} parent=27 // pred_check
          %p241 = pneg %p240
        $region34: #{tpu_custom_call.1} parent=27 // pred_check_branch
          %243 = sbr.rel (%p241) target = $region36
        $region35: #{tpu_custom_call.1} parent=27 // pred_region
          %v244 = vlaneseq
          %vm245 = vcmp.ge.s32.totalorder %v244, 0
          %vm246 = vcmp.lt.s32.totalorder %v244, 256
          %vm247 = vmand %vm245, %vm246
          %248 = vst.msk [vmem:[#allocation2] sm:$0x3] %vm247, 0.0
        $region36: #{tpu_custom_call.1} parent=27 // pred_fallthru
          _
        %v249 = vld [vmem:[%s201] sm:$0xff]
        %v250 = vld [vmem:[%s201 + $0x8] sm:$0xff]
        %v251 = vld [vmem:[%s201 + $0x10] sm:$0xff]
        %v252 = vld [vmem:[%s201 + $0x18] sm:$0xff]
        %v253 = vld [vmem:[%s201 + $0x20] sm:$0xff]
        %v254 = vld [vmem:[%s201 + $0x28] sm:$0xff]
        %v255 = vld [vmem:[%s201 + $0x30] sm:$0xff]
        %v256 = vld [vmem:[%s201 + $0x38] sm:$0xff]
        %v257 = vld [vmem:[%s201 + $0x40] sm:$0xff]
        %v258 = vld [vmem:[%s201 + $0x48] sm:$0xff]
        %v259 = vld [vmem:[%s201 + $0x50] sm:$0xff]
        %v260 = vld [vmem:[%s201 + $0x58] sm:$0xff]
        %v261 = vld [vmem:[%s201 + $0x60] sm:$0xff]
        %v262 = vld [vmem:[%s201 + $0x68] sm:$0xff]
        %v263 = vld [vmem:[%s201 + $0x70] sm:$0xff]
        %v264 = vld [vmem:[%s201 + $0x78] sm:$0xff]
        %v265 = vld [vmem:[%s201 + $0x80] sm:$0xff]
        %v266 = vld [vmem:[%s201 + $0x88] sm:$0xff]
        %v267 = vld [vmem:[%s201 + $0x90] sm:$0xff]
        %v268 = vld [vmem:[%s201 + $0x98] sm:$0xff]
        %v269 = vld [vmem:[%s201 + $0xa0] sm:$0xff]
        %v270 = vld [vmem:[%s201 + $0xa8] sm:$0xff]
        %v271 = vld [vmem:[%s201 + $0xb0] sm:$0xff]
        %v272 = vld [vmem:[%s201 + $0xb8] sm:$0xff]
        %v273 = vld [vmem:[%s201 + $0xc0] sm:$0xff]
        %v274 = vld [vmem:[%s201 + $0xc8] sm:$0xff]
        %v275 = vld [vmem:[%s201 + $0xd0] sm:$0xff]
        %v276 = vld [vmem:[%s201 + $0xd8] sm:$0xff]
        %v277 = vld [vmem:[%s201 + $0xe0] sm:$0xff]
        %v278 = vld [vmem:[%s201 + $0xe8] sm:$0xff]
        %v279 = vld [vmem:[%s201 + $0xf0] sm:$0xff]
        %v280 = vld [vmem:[%s201 + $0xf8] sm:$0xff]
        %v281 = vld [vmem:[%s201 + $0x100] sm:$0xff]
        %v282 = vld [vmem:[%s201 + $0x108] sm:$0xff]
        %v283 = vld [vmem:[%s201 + $0x110] sm:$0xff]
        %v284 = vld [vmem:[%s201 + $0x118] sm:$0xff]
        %v285 = vld [vmem:[%s201 + $0x120] sm:$0xff]
        %v286 = vld [vmem:[%s201 + $0x128] sm:$0xff]
        %v287 = vld [vmem:[%s201 + $0x130] sm:$0xff]
        %v288 = vld [vmem:[%s201 + $0x138] sm:$0xff]
        %v289 = vld [vmem:[%s201 + $0x140] sm:$0xff]
        %v290 = vld [vmem:[%s201 + $0x148] sm:$0xff]
        %v291 = vld [vmem:[%s201 + $0x150] sm:$0xff]
        %v292 = vld [vmem:[%s201 + $0x158] sm:$0xff]
        %v293 = vld [vmem:[%s201 + $0x160] sm:$0xff]
        %v294 = vld [vmem:[%s201 + $0x168] sm:$0xff]
        %v295 = vld [vmem:[%s0] sm:$0xff]
        %v296 = vld [vmem:[%s0 + $0x8] sm:$0xff]
        %v297 = vld [vmem:[%s0 + $0x10] sm:$0xff]
        %v298 = vld [vmem:[%s0 + $0x18] sm:$0xff]
        %v299 = vld [vmem:[%s0 + $0x20] sm:$0xff]
        %v300 = vld [vmem:[%s0 + $0x28] sm:$0xff]
        %v301 = vld [vmem:[%s0 + $0x30] sm:$0xff]
        %v302 = vld [vmem:[%s0 + $0x38] sm:$0xff]
        %v303 = vld [vmem:[%s0 + $0x40] sm:$0xff]
        %v304 = vld [vmem:[%s0 + $0x48] sm:$0xff]
        %v305 = vld [vmem:[%s0 + $0x50] sm:$0xff]
        %v306 = vld [vmem:[%s0 + $0x58] sm:$0xff]
        %v307 = vld [vmem:[%s0 + $0x60] sm:$0xff]
        %v308 = vld [vmem:[%s0 + $0x68] sm:$0xff]
        %v309 = vld [vmem:[%s0 + $0x70] sm:$0xff]
        %v310 = vld [vmem:[%s0 + $0x78] sm:$0xff]
        %v311 = vld [vmem:[%s0 + $0x80] sm:$0xff]
        %v312 = vld [vmem:[%s0 + $0x88] sm:$0xff]
        %v313 = vld [vmem:[%s0 + $0x90] sm:$0xff]
        %v314 = vld [vmem:[%s0 + $0x98] sm:$0xff]
        %v315 = vld [vmem:[%s0 + $0xa0] sm:$0xff]
        %v316 = vld [vmem:[%s0 + $0xa8] sm:$0xff]
        %v317 = vld [vmem:[%s0 + $0xb0] sm:$0xff]
        %319 = vset.pattern.permute.xlu0 0
        %320 = vperm.xlu0 %319, %v295
        %v321 = vpop.permute.xlu0 %320
        %324 = vset.pattern.permute.xlu0 0
        %325 = vperm.xlu0 %324, %v296
        %v326 = vpop.permute.xlu0 %325
        %329 = vset.pattern.permute.xlu0 0
        %330 = vperm.xlu0 %329, %v297
        %v331 = vpop.permute.xlu0 %330
        %334 = vset.pattern.permute.xlu0 0
        %335 = vperm.xlu0 %334, %v298
        %v336 = vpop.permute.xlu0 %335
        %339 = vset.pattern.permute.xlu0 0
        %340 = vperm.xlu0 %339, %v299
        %v341 = vpop.permute.xlu0 %340
        %344 = vset.pattern.permute.xlu0 0
        %345 = vperm.xlu0 %344, %v300
        %v346 = vpop.permute.xlu0 %345
        %349 = vset.pattern.permute.xlu0 0
        %350 = vperm.xlu0 %349, %v301
        %v351 = vpop.permute.xlu0 %350
        %354 = vset.pattern.permute.xlu0 0
        %355 = vperm.xlu0 %354, %v302
        %v356 = vpop.permute.xlu0 %355
        %359 = vset.pattern.permute.xlu0 0
        %360 = vperm.xlu0 %359, %v303
        %v361 = vpop.permute.xlu0 %360
        %364 = vset.pattern.permute.xlu0 0
        %365 = vperm.xlu0 %364, %v304
        %v366 = vpop.permute.xlu0 %365
        %369 = vset.pattern.permute.xlu0 0
        %370 = vperm.xlu0 %369, %v305
        %v371 = vpop.permute.xlu0 %370
        %374 = vset.pattern.permute.xlu0 0
        %375 = vperm.xlu0 %374, %v306
        %v376 = vpop.permute.xlu0 %375
        %379 = vset.pattern.permute.xlu0 0
        %380 = vperm.xlu0 %379, %v307
        %v381 = vpop.permute.xlu0 %380
        %384 = vset.pattern.permute.xlu0 0
        %385 = vperm.xlu0 %384, %v308
        %v386 = vpop.permute.xlu0 %385
        %389 = vset.pattern.permute.xlu0 0
        %390 = vperm.xlu0 %389, %v309
        %v391 = vpop.permute.xlu0 %390
        %394 = vset.pattern.permute.xlu0 0
        %395 = vperm.xlu0 %394, %v310
        %v396 = vpop.permute.xlu0 %395
        %399 = vset.pattern.permute.xlu0 0
        %400 = vperm.xlu0 %399, %v311
        %v401 = vpop.permute.xlu0 %400
        %404 = vset.pattern.permute.xlu0 0
        %405 = vperm.xlu0 %404, %v312
        %v406 = vpop.permute.xlu0 %405
        %409 = vset.pattern.permute.xlu0 0
        %410 = vperm.xlu0 %409, %v313
        %v411 = vpop.permute.xlu0 %410
        %414 = vset.pattern.permute.xlu0 0
        %415 = vperm.xlu0 %414, %v314
        %v416 = vpop.permute.xlu0 %415
        %419 = vset.pattern.permute.xlu0 0
        %420 = vperm.xlu0 %419, %v315
        %v421 = vpop.permute.xlu0 %420
        %424 = vset.pattern.permute.xlu0 0
        %425 = vperm.xlu0 %424, %v316
        %v426 = vpop.permute.xlu0 %425
        %429 = vset.pattern.permute.xlu0 0
        %430 = vperm.xlu0 %429, %v317
        %v431 = vpop.permute.xlu0 %430
        %v433 = vmul.f32 %v249, %v321
        %v434 = vmul.f32 %v250, %v321
        %v435 = vmul.f32 %v251, %v326
        %v436 = vmul.f32 %v252, %v326
        %v437 = vmul.f32 %v253, %v331
        %v438 = vmul.f32 %v254, %v331
        %v439 = vmul.f32 %v255, %v336
        %v440 = vmul.f32 %v256, %v336
        %v441 = vmul.f32 %v257, %v341
        %v442 = vmul.f32 %v258, %v341
        %v443 = vmul.f32 %v259, %v346
        %v444 = vmul.f32 %v260, %v346
        %v445 = vmul.f32 %v261, %v351
        %v446 = vmul.f32 %v262, %v351
        %v447 = vmul.f32 %v263, %v356
        %v448 = vmul.f32 %v264, %v356
        %v449 = vmul.f32 %v265, %v361
        %v450 = vmul.f32 %v266, %v361
        %v451 = vmul.f32 %v267, %v366
        %v452 = vmul.f32 %v268, %v366
        %v453 = vmul.f32 %v269, %v371
        %v454 = vmul.f32 %v270, %v371
        %v455 = vmul.f32 %v271, %v376
        %v456 = vmul.f32 %v272, %v376
        %v457 = vmul.f32 %v273, %v381
        %v458 = vmul.f32 %v274, %v381
        %v459 = vmul.f32 %v275, %v386
        %v460 = vmul.f32 %v276, %v386
        %v461 = vmul.f32 %v277, %v391
        %v462 = vmul.f32 %v278, %v391
        %v463 = vmul.f32 %v279, %v396
        %v464 = vmul.f32 %v280, %v396
        %v465 = vmul.f32 %v281, %v401
        %v466 = vmul.f32 %v282, %v401
        %v467 = vmul.f32 %v283, %v406
        %v468 = vmul.f32 %v284, %v406
        %v469 = vmul.f32 %v285, %v411
        %v470 = vmul.f32 %v286, %v411
        %v471 = vmul.f32 %v287, %v416
        %v472 = vmul.f32 %v288, %v416
        %v473 = vmul.f32 %v289, %v421
        %v474 = vmul.f32 %v290, %v421
        %v475 = vmul.f32 %v291, %v426
        %v476 = vmul.f32 %v292, %v426
        %v477 = vmul.f32 %v293, %v431
        %v478 = vmul.f32 %v294, %v431
        %v479 = vadd.f32 %v433, %v435
        %v480 = vadd.f32 %v479, %v437
        %v481 = vadd.f32 %v480, %v439
        %v482 = vadd.f32 %v481, %v441
        %v483 = vadd.f32 %v482, %v443
        %v484 = vadd.f32 %v483, %v445
        %v485 = vadd.f32 %v484, %v447
        %v486 = vadd.f32 %v485, %v449
        %v487 = vadd.f32 %v486, %v451
        %v488 = vadd.f32 %v487, %v453
        %v489 = vadd.f32 %v488, %v455
        %v490 = vadd.f32 %v489, %v457
        %v491 = vadd.f32 %v490, %v459
        %v492 = vadd.f32 %v491, %v461
        %v493 = vadd.f32 %v492, %v463
        %v494 = vadd.f32 %v493, %v465
        %v495 = vadd.f32 %v494, %v467
        %v496 = vadd.f32 %v495, %v469
        %v497 = vadd.f32 %v496, %v471
        %v498 = vadd.f32 %v497, %v473
        %v499 = vadd.f32 %v498, %v475
        %v500 = vadd.f32 %v499, %v477
        %v501 = vrot.slane %v500, 4
        %v502 = vadd.f32 %v500, %v501
        %v503 = vrot.slane %v502, 2
        %v504 = vadd.f32 %v502, %v503
        %v505 = vrot.slane %v504, 1
        %v506 = vadd.f32 %v504, %v505
        %v507 = vadd.f32 %v434, %v436
        %v508 = vadd.f32 %v507, %v438
        %v509 = vadd.f32 %v508, %v440
        %v510 = vadd.f32 %v509, %v442
        %v511 = vadd.f32 %v510, %v444
        %v512 = vadd.f32 %v511, %v446
        %v513 = vadd.f32 %v512, %v448
        %v514 = vadd.f32 %v513, %v450
        %v515 = vadd.f32 %v514, %v452
        %v516 = vadd.f32 %v515, %v454
        %v517 = vadd.f32 %v516, %v456
        %v518 = vadd.f32 %v517, %v458
        %v519 = vadd.f32 %v518, %v460
        %v520 = vadd.f32 %v519, %v462
        %v521 = vadd.f32 %v520, %v464
        %v522 = vadd.f32 %v521, %v466
        %v523 = vadd.f32 %v522, %v468
        %v524 = vadd.f32 %v523, %v470
        %v525 = vadd.f32 %v524, %v472
        %v526 = vadd.f32 %v525, %v474
        %v527 = vadd.f32 %v526, %v476
        %v528 = vadd.f32 %v527, %v478
        %v529 = vrot.slane %v528, 4
        %v530 = vadd.f32 %v528, %v529
        %v531 = vrot.slane %v530, 2
        %v532 = vadd.f32 %v530, %v531
        %v533 = vrot.slane %v532, 1
        %v534 = vadd.f32 %v532, %v533
        %v535 = vmul.f32 %v506, 1.5
        %v536 = vmul.f32 %v534, 1.5
        %v537 = vadd.f32 %v535, 0.5
        %v538 = vadd.f32 %v536, 0.5
        %v541 = vcombine.low %v537, %v538
        %v543 = vunpack.c.l.s4 1966171168
        %v544 = vunpack.c.0.s8 %v543
        %v545 = vlaneseq
        %v546 = vshrl.u32 %v545, 7
        %v547 = vsub.s32 %v544, %v546
        %v548 = vrot.slane %v541, %v547
        %v550 = vunpack.c.l.s4 1966171168
        %v551 = vunpack.c.0.s8 %v550
        %v552 = vlaneseq
        %v553 = vshrl.u32 %v552, 7
        %v554 = vsub.s32 %v551, %v553
        %v555 = vrot.slane %v548, %v554
        %v557 = vlaneseq
        %vm558 = vcmp.ge.s32.totalorder %v557, 0
        %vm559 = vcmp.lt.s32.totalorder %v557, 256
        %vm560 = vmand %vm558, %vm559
        %561 = vst.msk [vmem:[%s221] sm:$0x3] %vm560, %v555
        %v562 = vld [vmem:[#allocation2] sm:$0x3]
        %v565 = vcombine.low %v506, %v534
        %v567 = vunpack.c.l.s4 1966171168
        %v568 = vunpack.c.0.s8 %v567
        %v569 = vlaneseq
        %v570 = vshrl.u32 %v569, 7
        %v571 = vsub.s32 %v568, %v570
        %v572 = vrot.slane %v565, %v571
        %v574 = vunpack.c.l.s4 1966171168
        %v575 = vunpack.c.0.s8 %v574
        %v576 = vlaneseq
        %v577 = vshrl.u32 %v576, 7
        %v578 = vsub.s32 %v575, %v577
        %v579 = vrot.slane %v572, %v578
        %v581 = vadd.f32 %v562, %v579
        %582 = vst.msk [vmem:[#allocation2] sm:$0x3] %vm560, %v581
        // Predicated region
        $region37: #{tpu_custom_call.1} parent=27 // pred_check
          %p583 = pneg %p240
        $region38: #{tpu_custom_call.1} parent=27 // pred_check_branch
          %585 = sbr.rel (%p583) target = $region40
        $region39: #{tpu_custom_call.1} parent=27 // pred_region
          %v586 = vld [vmem:[#allocation2] sm:$0x3]
          %v588 = vlaneseq
          %v589 = vshrl.u32 %v588, 7
          %v590 = vsub.s32 0, %v589
          %v591 = vrot.slane %v586, %v590
          %v592 = vlaneseq
          %v593 = vshrl.u32 %v592, 7
          %v594 = vsub.s32 1, %v593
          %v595 = vrot.slane %v586, %v594
          %vm598 = vcmask 1040384
          %v599 = vsel %vm598, %v591, 0.0
          %v600 = vsel %vm598, %v595, 0.0
          %v601 = vadd.f32 %v599, %v600
          %602 = vadd.xlane.f32.xlu0 %v601
          %v603 = vpop.xlane.xlu0 %602
          %v604 = vrot.slane %v603, 4
          %v605 = vadd.f32 %v603, %v604
          %v606 = vrot.slane %v605, 2
          %v607 = vadd.f32 %v605, %v606
          %v608 = vrot.slane %v607, 1
          %v609 = vadd.f32 %v607, %v608
          %s610 = vtos %v609
          %v611 = vstv %s610
          %vm612 = vcmask 0
          %613 = vst.msk [vmem:[%s239] sm:$0x1] %vm612, %v611
        $region40: #{tpu_custom_call.1} parent=27 // pred_fallthru
          _
        %s614 = sand.u32 %s103, 1
        %s615 = scalar_lea.sflag [#allocation5], %s614
        %s616 = sand.u32 %s103, 1
        %s617 = smul.addr %s616, 2
        %s618 = scalar_lea.vmem [#allocation6], %s617
        %p619 = scmp.lt.s32.totalorder %s26, 1
        %s620 = scalar_select %p619, %s26, 1
        %p621 = scmp.lt.s32.totalorder %s27, 0
        %s622 = scalar_select %p621, %s27, 0
        %s623 = sadd.s32 %s622, %s620
        %s624 = scalar_lea.vmem %s3, %s623
        // Predicated region
        $region41: #{tpu_custom_call.1} parent=27 // pred_check
          %p625 = pneg %p113
        $region42: #{tpu_custom_call.1} parent=27 // pred_check_branch
          %627 = sbr.rel (%p625) target = $region44
        $region43: #{tpu_custom_call.1} parent=27 // pred_region
          %s628 = sadd.s32 %s27, %s28
          %s629 = smul.u32 2, %s628
          %s631 = ssub.s32 32, 32
          %632 = vsyncadd %s615, %s631
          %s633 = smul.addr %s26, 2
          %s634 = sadd.s32 %s629, %s633
          %s635 = smul.addr %s634, 16
          %s636 = scalar_lea.hbm %s2, %s635
          %s638 = sshll.u32 %s618, 4
          %s639 = int_to_ptr.vmem [resolvable:$true] %s638
          %641 = dma.vmem_to_hbm [thread:$0]  %s639, 32, %s636, %s615
        $region44: #{tpu_custom_call.1} parent=27 // pred_fallthru
          _
        // Predicated region
        $region45: #{tpu_custom_call.1} parent=27 // pred_check
          %p642 = pneg %p141
        $region46: #{tpu_custom_call.1} parent=27 // pred_check_branch
          %644 = sbr.rel (%p642) target = $region48
        $region47: #{tpu_custom_call.1} parent=27 // pred_region
          _
        $region48: #{tpu_custom_call.1} parent=27 // pred_fallthru
          _
      $region28: #{tpu_custom_call.1} parent=5 // pred_fallthru
        _
      %p645 = scmp.le.s32.totalorder 2, %s16
      // Predicated region
      $region49: #{tpu_custom_call.1} parent=5 // pred_check
        %p646 = pneg %p645
      $region50: #{tpu_custom_call.1} parent=5 // pred_check_branch
        %648 = sbr.rel (%p646) target = $region52
      $region51: #{tpu_custom_call.1} parent=5 // pred_region
        %s649 = ssub.s32 %s16, 2
        // Predicated region
        $region53: #{tpu_custom_call.1} parent=51 // pred_check
          %p650 = pneg %p119
        $region54: #{tpu_custom_call.1} parent=51 // pred_check_branch
          %652 = sbr.rel (%p650) target = $region56
        $region55: #{tpu_custom_call.1} parent=51 // pred_region
          %s653 = sand.u32 %s104, 1
          %s654 = scalar_lea.sflag [#allocation5], %s653
          %s655 = sand.u32 %s104, 1
          %s656 = smul.addr %s655, 2
          %s657 = scalar_lea.vmem [#allocation6], %s656
          %658 = dma.done %s654, 32
        $region56: #{tpu_custom_call.1} parent=51 // pred_fallthru
          _
        // Predicated region
        $region57: #{tpu_custom_call.1} parent=51 // pred_check
          %p659 = pneg %p147
        $region58: #{tpu_custom_call.1} parent=51 // pred_check_branch
          %661 = sbr.rel (%p659) target = $region60
        $region59: #{tpu_custom_call.1} parent=51 // pred_region
          %p662 = scmp.lt.s32.totalorder %s29, 1
          %s663 = scalar_select %p662, %s29, 1
          %p664 = scmp.lt.s32.totalorder %s30, 0
          %s665 = scalar_select %p664, %s30, 0
          %s666 = sadd.s32 %s665, %s663
          %s667 = scalar_lea.vmem %s3, %s666
        $region60: #{tpu_custom_call.1} parent=51 // pred_fallthru
          _
      $region52: #{tpu_custom_call.1} parent=5 // pred_fallthru
        _
    $region6: #{tpu_custom_call.1} parent=1 // loop_footer
      %s20 = sadd.s32 1, %s16
    $region7: #{tpu_custom_call.1} parent=1 // loop_footer_branch
      %15 = sbr.rel target = $region3
    $region8: #{tpu_custom_call.1} parent=1 // loop_exit
      _
    %668 = vsyncpa [#allocation4], 1
    %s669 = scalar_lea.sflag [#allocation4], 1
    %670 = vsyncpa %s669, 1
    %671 = vsyncpa [#allocation5], 1
    %s672 = scalar_lea.sflag [#allocation5], 1
    %673 = vsyncpa %s672, 1

</llo_original>
